<compile_context>
chip_gen: v5e
topology: v5e:2x2
jax: 0.10.0
libtpu: 0.0.40
codegen_flags: <defaults>
</compile_context>

<pallas_src>
import functools
import math

import jax
import jax.numpy as jnp
from jax.experimental import pallas as pl
from jax.experimental.pallas import tpu as pltpu

SUBLANE_BF16 = 16   # bf16 packs 16 rows per vreg; keep batch tiles multiples of this


def _round_up(x, m):
    return ((x + m - 1) // m) * m


def dqn_mlp_kernel(x_ref, w1_ref, b1_ref, w2_ref, b2_ref, w3_ref, b3_ref, o_ref):
    """Fused forward for one batch tile: relu(x@W1+b1) -> relu(@W2+b2) -> @W3+b3.

    x / W are bf16 (MXU-native); biases, accumulation and output are f32.
    """
    x = x_ref[...]
    h1 = jnp.dot(x, w1_ref[...], preferred_element_type=jnp.float32) + b1_ref[...]
    h1 = jnp.maximum(h1, 0.0).astype(jnp.bfloat16)
    h2 = jnp.dot(h1, w2_ref[...], preferred_element_type=jnp.float32) + b2_ref[...]
    h2 = jnp.maximum(h2, 0.0).astype(jnp.bfloat16)
    o_ref[...] = (
        jnp.dot(h2, w3_ref[...], preferred_element_type=jnp.float32) + b3_ref[...]
    )


def _pick_batch_tile(batch, block_b):
    """Sublane-aligned batch tile; prefer >=2 grid steps so v7x's 2 TCs engage."""
    tb = max(SUBLANE_BF16, min(block_b, _round_up(batch, SUBLANE_BF16)))
    tb = _round_up(tb, SUBLANE_BF16)
    if batch > SUBLANE_BF16:
        tb = min(tb, _round_up(math.ceil(batch / 2), SUBLANE_BF16))
    return tb


@functools.partial(jax.jit, static_argnames=("block_b",))
def dqn_forward(state, params, *, block_b=2048):
    """state (B, S) float32 -> actions (B, A) float32.

    The batch is tiled into `block_b`-row blocks that stream through a
    double-buffered pipeline while the (tiny) weights stay resident in VMEM.
    """
    w1, b1, w2, b2, w3, b3 = params
    B, S = state.shape
    D1 = w1.shape[1]
    D2 = w2.shape[1]
    A = w3.shape[1]

    TB = _pick_batch_tile(B, block_b)
    B_p = _round_up(B, TB)

    # Streamed input: bf16 (halves input DMA bytes); only the batch dim is
    # padded. The feature dim stays unpadded — full-array-dim BlockSpec
    # exemption; Mosaic handles the small contraction dim internally.
    x = state.astype(jnp.bfloat16)
    if B_p != B:
        x = jnp.pad(x, ((0, B_p - B), (0, 0)))

    w1b = w1.astype(jnp.bfloat16)
    w2b = w2.astype(jnp.bfloat16)
    w3b = w3.astype(jnp.bfloat16)
    b1f = b1.astype(jnp.float32)
    b2f = b2.astype(jnp.float32)
    b3f = b3.astype(jnp.float32)

    grid = (B_p // TB,)

    in_specs = [
        # state streams over the batch grid axis
        pl.BlockSpec((TB, S), lambda i: (i, 0)),
        # weights / biases: full (unpadded) blocks, resident across grid steps
        pl.BlockSpec((S, D1), lambda i: (0, 0)),
        pl.BlockSpec((1, D1), lambda i: (0, 0)),
        pl.BlockSpec((D1, D2), lambda i: (0, 0)),
        pl.BlockSpec((1, D2), lambda i: (0, 0)),
        pl.BlockSpec((D2, A), lambda i: (0, 0)),
        pl.BlockSpec((1, A), lambda i: (0, 0)),
    ]
    # Output emitted with the real action dim (no lane padding, no post-slice).
    out_specs = pl.BlockSpec((TB, A), lambda i: (i, 0))

    flops = 2 * B_p * (S * D1 + D1 * D2 + D2 * A)
    bytes_accessed = (
        2 * B_p * S                            # bf16 state stream
        + 2 * (S * D1 + D1 * D2 + D2 * A)      # bf16 weights (resident)
        + 4 * (D1 + D2 + A)                    # f32 biases
        + 4 * B_p * A                          # f32 output writeback
    )

    out = pl.pallas_call(
        dqn_mlp_kernel,
        out_shape=jax.ShapeDtypeStruct((B_p, A), jnp.float32),
        grid_spec=pltpu.PrefetchScalarGridSpec(
            num_scalar_prefetch=0,
            grid=grid,
            in_specs=in_specs,
            out_specs=out_specs,
        ),
        compiler_params=pltpu.CompilerParams(
            dimension_semantics=("parallel",),   # shards batch grid across TCs on v7x
            vmem_limit_bytes=32 << 20,           # tiny footprint; safe on v7x 64 MiB
        ),
        cost_estimate=pl.CostEstimate(
            flops=flops, transcendentals=0, bytes_accessed=bytes_accessed
        ),
    )(x, w1b, b1f, w2b, b2f, w3b, b3f)

    # Strip batch padding only (output lane dim is already exact).
    return out[:B] if B_p != B else out


def init_params(key, state_shape, n_dense_1, n_dense_2, action_shape):
    """Deterministic init mimicking PyTorch nn.Linear default U(-1/sqrt(in), 1/sqrt(in))."""
    def linear(k, fan_in, fan_out):
        kw, kb = jax.random.split(k)
        bound = 1.0 / jnp.sqrt(jnp.float32(fan_in))
        w = jax.random.uniform(kw, (fan_in, fan_out), jnp.float32, -bound, bound)
        b = jax.random.uniform(kb, (1, fan_out), jnp.float32, -bound, bound)
        return w, b

    k1, k2, k3 = jax.random.split(key, 3)
    w1, b1 = linear(k1, state_shape, n_dense_1)
    w2, b2 = linear(k2, n_dense_1, n_dense_2)
    w3, b3 = linear(k3, n_dense_2, action_shape)
    return (w1, b1, w2, b2, w3, b3)


# TODO(synk): Adam optimizer + MSELoss training step from the PyTorch module are
# training machinery, not part of forward(); not implemented here.

if __name__ == "__main__":
    # Small shapes consistent with the module: batch=8 states of dim 16,
    # two hidden layers of 32, 8 discrete actions. (For real workloads, batch
    # many states per call — the kernel tiles the batch automatically.)
    B, STATE, D1, D2, ACTIONS = 8, 16, 32, 32, 8

    key = jax.random.PRNGKey(0)
    k_params, k_state = jax.random.split(key)

    params = init_params(k_params, STATE, D1, D2, ACTIONS)
    state = jax.random.normal(k_state, (B, STATE), jnp.float32)

    actions = dqn_forward(state, params)
    jax.block_until_ready(actions)

    # Pure-JAX f32 reference of the same forward semantics (kernel matmuls are
    # bf16 with f32 accumulation, so tolerance is relaxed accordingly).
    w1, b1, w2, b2, w3, b3 = params
    ref = jnp.maximum(state @ w1 + b1, 0.0)
    ref = jnp.maximum(ref @ w2 + b2, 0.0)
    ref = ref @ w3 + b3
    assert actions.shape == (B, ACTIONS) and actions.dtype == jnp.float32
    assert jnp.allclose(actions, ref, atol=3e-2, rtol=3e-2)

    print("KERNEL_OK")
</pallas_src>

<mosaic_0001>
module attributes {stable_mosaic.version = 11 : i64} {
  func.func @dqn_mlp_kernel(%arg0: i32, %arg1: memref<16x16xbf16, #tpu.memory_space<vmem>>, %arg2: memref<16x32xbf16, #tpu.memory_space<vmem>>, %arg3: memref<1x32xf32, #tpu.memory_space<vmem>>, %arg4: memref<32x32xbf16, #tpu.memory_space<vmem>>, %arg5: memref<1x32xf32, #tpu.memory_space<vmem>>, %arg6: memref<32x8xbf16, #tpu.memory_space<vmem>>, %arg7: memref<1x8xf32, #tpu.memory_space<vmem>>, %arg8: memref<16x8xf32, #tpu.memory_space<vmem>>) attributes {dimension_semantics = [#tpu.dimension_semantics<parallel>], iteration_bounds = array<i64: 1>, scalar_prefetch = 0 : i64, scratch_operands = 0 : i64, tpu.core_type = #tpu.core_type<tc>, window_params = [{transform_indices = @transform_0, window_bounds = array<i64: 16, 16>}, {pipeline_mode = #tpu.pipeline_mode<synchronous>, transform_indices = @transform_1, window_bounds = array<i64: 16, 32>}, {pipeline_mode = #tpu.pipeline_mode<synchronous>, transform_indices = @transform_2, window_bounds = array<i64: 1, 32>}, {pipeline_mode = #tpu.pipeline_mode<synchronous>, transform_indices = @transform_3, window_bounds = array<i64: 32, 32>}, {pipeline_mode = #tpu.pipeline_mode<synchronous>, transform_indices = @transform_4, window_bounds = array<i64: 1, 32>}, {pipeline_mode = #tpu.pipeline_mode<synchronous>, transform_indices = @transform_5, window_bounds = array<i64: 32, 8>}, {pipeline_mode = #tpu.pipeline_mode<synchronous>, transform_indices = @transform_6, window_bounds = array<i64: 1, 8>}, {transform_indices = @transform_7, window_bounds = array<i64: 16, 8>}]} {
    %c0 = arith.constant 0 : index
    %c0_0 = arith.constant 0 : index
    %0 = vector.load %arg1[%c0, %c0_0] : memref<16x16xbf16, #tpu.memory_space<vmem>>, vector<16x16xbf16>
    %c0_1 = arith.constant 0 : index
    %c0_2 = arith.constant 0 : index
    %1 = vector.load %arg2[%c0_1, %c0_2] : memref<16x32xbf16, #tpu.memory_space<vmem>>, vector<16x32xbf16>
    %cst = arith.constant dense<0.000000e+00> : vector<16x32xf32>
    %2 = tpu.matmul %0, %1, %cst {dimension_numbers = #tpu.dot_dimension_numbers<[1], [0], [0], [1], [0, 0, 1, 1], [], []>} : vector<16x16xbf16>, vector<16x32xbf16>, vector<16x32xf32> -> vector<16x32xf32>
    %c0_3 = arith.constant 0 : index
    %c0_4 = arith.constant 0 : index
    %3 = vector.load %arg3[%c0_3, %c0_4] : memref<1x32xf32, #tpu.memory_space<vmem>>, vector<1x32xf32>
    %4 = vector.broadcast %3 : vector<1x32xf32> to vector<16x32xf32>
    %5 = arith.addf %2, %4 : vector<16x32xf32>
    %cst_5 = arith.constant 0.000000e+00 : f32
    %6 = vector.broadcast %cst_5 : f32 to vector<16x32xf32>
    %7 = arith.maximumf %5, %6 : vector<16x32xf32>
    %8 = arith.truncf %7 : vector<16x32xf32> to vector<16x32xbf16>
    %c0_6 = arith.constant 0 : index
    %c0_7 = arith.constant 0 : index
    %9 = vector.load %arg4[%c0_6, %c0_7] : memref<32x32xbf16, #tpu.memory_space<vmem>>, vector<32x32xbf16>
    %cst_8 = arith.constant dense<0.000000e+00> : vector<16x32xf32>
    %10 = tpu.matmul %8, %9, %cst_8 {dimension_numbers = #tpu.dot_dimension_numbers<[1], [0], [0], [1], [0, 0, 1, 1], [], []>} : vector<16x32xbf16>, vector<32x32xbf16>, vector<16x32xf32> -> vector<16x32xf32>
    %c0_9 = arith.constant 0 : index
    %c0_10 = arith.constant 0 : index
    %11 = vector.load %arg5[%c0_9, %c0_10] : memref<1x32xf32, #tpu.memory_space<vmem>>, vector<1x32xf32>
    %12 = vector.broadcast %11 : vector<1x32xf32> to vector<16x32xf32>
    %13 = arith.addf %10, %12 : vector<16x32xf32>
    %cst_11 = arith.constant 0.000000e+00 : f32
    %14 = vector.broadcast %cst_11 : f32 to vector<16x32xf32>
    %15 = arith.maximumf %13, %14 : vector<16x32xf32>
    %16 = arith.truncf %15 : vector<16x32xf32> to vector<16x32xbf16>
    %c0_12 = arith.constant 0 : index
    %c0_13 = arith.constant 0 : index
    %17 = vector.load %arg6[%c0_12, %c0_13] : memref<32x8xbf16, #tpu.memory_space<vmem>>, vector<32x8xbf16>
    %cst_14 = arith.constant dense<0.000000e+00> : vector<16x8xf32>
    %18 = tpu.matmul %16, %17, %cst_14 {dimension_numbers = #tpu.dot_dimension_numbers<[1], [0], [0], [1], [0, 0, 1, 1], [], []>} : vector<16x32xbf16>, vector<32x8xbf16>, vector<16x8xf32> -> vector<16x8xf32>
    %c0_15 = arith.constant 0 : index
    %c0_16 = arith.constant 0 : index
    %19 = vector.load %arg7[%c0_15, %c0_16] : memref<1x8xf32, #tpu.memory_space<vmem>>, vector<1x8xf32>
    %20 = vector.broadcast %19 : vector<1x8xf32> to vector<16x8xf32>
    %21 = arith.addf %18, %20 : vector<16x8xf32>
    %c0_17 = arith.constant 0 : index
    %c0_18 = arith.constant 0 : index
    %22 = vector.load %arg8[%c0_17, %c0_18] : memref<16x8xf32, #tpu.memory_space<vmem>>, vector<16x8xf32>
    tpu.vector_store %arg8[%c0_17, %c0_18], %21 {strides = array<i32>} : memref<16x8xf32, #tpu.memory_space<vmem>>, vector<16x8xf32>,
    return
  }
  func.func @transform_0(%arg0: i32) -> (i32, i32) {
    %c0_i32 = arith.constant 0 : i32
    %c0_i32_0 = arith.constant 0 : i32
    return %arg0, %c0_i32 : i32, i32
  }
  func.func @transform_1(%arg0: i32) -> (i32, i32) {
    %c0_i32 = arith.constant 0 : i32
    %c0_i32_0 = arith.constant 0 : i32
    %c0_i32_1 = arith.constant 0 : i32
    return %c0_i32, %c0_i32_0 : i32, i32
  }
  func.func @transform_2(%arg0: i32) -> (i32, i32) {
    %c0_i32 = arith.constant 0 : i32
    %c0_i32_0 = arith.constant 0 : i32
    %c0_i32_1 = arith.constant 0 : i32
    return %c0_i32, %c0_i32_0 : i32, i32
  }
  func.func @transform_3(%arg0: i32) -> (i32, i32) {
    %c0_i32 = arith.constant 0 : i32
    %c0_i32_0 = arith.constant 0 : i32
    %c0_i32_1 = arith.constant 0 : i32
    return %c0_i32, %c0_i32_0 : i32, i32
  }
  func.func @transform_4(%arg0: i32) -> (i32, i32) {
    %c0_i32 = arith.constant 0 : i32
    %c0_i32_0 = arith.constant 0 : i32
    %c0_i32_1 = arith.constant 0 : i32
    return %c0_i32, %c0_i32_0 : i32, i32
  }
  func.func @transform_5(%arg0: i32) -> (i32, i32) {
    %c0_i32 = arith.constant 0 : i32
    %c0_i32_0 = arith.constant 0 : i32
    %c0_i32_1 = arith.constant 0 : i32
    return %c0_i32, %c0_i32_0 : i32, i32
  }
  func.func @transform_6(%arg0: i32) -> (i32, i32) {
    %c0_i32 = arith.constant 0 : i32
    %c0_i32_0 = arith.constant 0 : i32
    %c0_i32_1 = arith.constant 0 : i32
    return %c0_i32, %c0_i32_0 : i32, i32
  }
  func.func @transform_7(%arg0: i32) -> (i32, i32) {
    %c0_i32 = arith.constant 0 : i32
    %c0_i32_0 = arith.constant 0 : i32
    return %arg0, %c0_i32 : i32, i32
  }
}

</mosaic_0001>

<llo_original>
// kernel: dqn_forward.1
$region0: #{dqn_forward.1}
  #allocation0 [shape = 'u32[]', space=smem, size = 0x4, offset = 0x4, fixed_abs, tag = 'smem constant byte address 0x4 - core index']
  #allocation1 [shape = 'u32[72,128]{1,0:T(1,128)}', space=vmem, size = 0x9000, scoped, tag = 'internal scratch']
  %s0 = inlined_call_operand.vmem [shape: bf16[16,16], index: 0, kind: input, shape index: {}]
  %s1 = inlined_call_operand.vmem [shape: bf16[16,32], index: 1, kind: input, shape index: {}]
  %s2 = inlined_call_operand.vmem [shape: f32[1,32], index: 2, kind: input, shape index: {}]
  %s3 = inlined_call_operand.vmem [shape: bf16[32,32], index: 3, kind: input, shape index: {}]
  %s4 = inlined_call_operand.vmem [shape: f32[1,32], index: 4, kind: input, shape index: {}]
  %s5 = inlined_call_operand.vmem [shape: bf16[32,8], index: 5, kind: input, shape index: {}]
  %s6 = inlined_call_operand.vmem [shape: f32[1,8], index: 6, kind: input, shape index: {}]
  %s7 = inlined_call_operand.vmem [shape: f32[16,8], index: 7, kind: output, shape index: {}]
  %s8 = sld [smem:[#allocation0]]
  $region38: #{dqn_forward.1} parent=0
    _
  %s10 = ssub.s32 1, %s8
  %s11 = scalar_select 0, %s10, %s8
  // Predicated region
  $region2: #{dqn_forward.1} parent=0 // pred_check
    _
  $region3: #{dqn_forward.1} parent=0 // pred_check_branch
    %13 = sbr.rel (0) target = $region5
  $region4: #{dqn_forward.1} parent=0 // pred_region
    _
  $region5: #{dqn_forward.1} parent=0 // pred_fallthru
    _
  // Predicated region
  $region6: #{dqn_forward.1} parent=0 // pred_check
    _
  $region7: #{dqn_forward.1} parent=0 // pred_check_branch
    %15 = sbr.rel (0) target = $region9
  $region8: #{dqn_forward.1} parent=0 // pred_region
    _
  $region9: #{dqn_forward.1} parent=0 // pred_fallthru
    _
  // Predicated region
  $region10: #{dqn_forward.1} parent=0 // pred_check
    _
  $region11: #{dqn_forward.1} parent=0 // pred_check_branch
    %17 = sbr.rel (0) target = $region13
  $region12: #{dqn_forward.1} parent=0 // pred_region
    _
  $region13: #{dqn_forward.1} parent=0 // pred_fallthru
    _
  // Predicated region
  $region14: #{dqn_forward.1} parent=0 // pred_check
    _
  $region15: #{dqn_forward.1} parent=0 // pred_check_branch
    %19 = sbr.rel (0) target = $region17
  $region16: #{dqn_forward.1} parent=0 // pred_region
    _
  $region17: #{dqn_forward.1} parent=0 // pred_fallthru
    _
  // Predicated region
  $region18: #{dqn_forward.1} parent=0 // pred_check
    _
  $region19: #{dqn_forward.1} parent=0 // pred_check_branch
    %21 = sbr.rel (0) target = $region21
  $region20: #{dqn_forward.1} parent=0 // pred_region
    _
  $region21: #{dqn_forward.1} parent=0 // pred_fallthru
    _
  // Predicated region
  $region22: #{dqn_forward.1} parent=0 // pred_check
    _
  $region23: #{dqn_forward.1} parent=0 // pred_check_branch
    %23 = sbr.rel (0) target = $region25
  $region24: #{dqn_forward.1} parent=0 // pred_region
    _
  $region25: #{dqn_forward.1} parent=0 // pred_fallthru
    _
  // Predicated region
  $region26: #{dqn_forward.1} parent=0 // pred_check
    _
  $region27: #{dqn_forward.1} parent=0 // pred_check_branch
    %25 = sbr.rel (0) target = $region29
  $region28: #{dqn_forward.1} parent=0 // pred_region
    _
  $region29: #{dqn_forward.1} parent=0 // pred_fallthru
    _
  %v27 = vld [vmem:[%s0] sm:$0xf]
  %v28 = vld [vmem:[%s0 + $0x4] sm:$0xf]
  %v29 = vld [vmem:[%s1] sm:$0xf]
  %v30 = vld [vmem:[%s1 + $0x4] sm:$0xf]
  %v31 = vld [vmem:[%s2] sm:$0x1]
  %v33 = vperm.slane %v31, 0
  %v37 = vunpack.c.l.b16 %v27
  %v38 = vunpack.c.l.b16 %v28
  %v39 = vpack.c.b16 %v38, %v37
  %v42 = vunpack.c.l.b16 %v29
  %v43 = vunpack.c.l.b16 %v30
  %v44 = vpack.c.b16 %v43, %v42
  %vm46 = vcmask 130048
  %v48 = vsel %vm46, %v39, 0
  %50 = vmatpush.bf16.msra.mxu0 0
  %51 = vmatpush.bf16.msra.mxu0 0
  %52 = vmatpush.bf16.msra.mxu0 0
  %53 = vmatpush.bf16.msra.mxu0 0
  %54 = vmatpush.bf16.msra.mxu0 0
  %55 = vmatpush.bf16.msra.mxu0 0
  %56 = vmatpush.bf16.msra.mxu0 0
  %57 = vmatpush.bf16.msra.mxu0 %v44
  %58 = vmatmul.bf16.gmra.mxu0 %v48
  %v59 = vpop.f32.mrf.mxu0
  %v60 = vadd.f32 %v33, %v59
  %v61 = vpop.f32.mrf.mxu0
  %v62 = vadd.f32 %v33, %v61
  %63 = vdwg.mxu0
  %v64 = vmax.f32 %v60, 0.0
  %v65 = vmax.f32 %v62, 0.0
  %v66 = vpack.c.bf16 %v65, %v64
  %v67 = vld [vmem:[%s3] sm:$0xf]
  %v68 = vld [vmem:[%s3 + $0x4] sm:$0xf]
  %v69 = vld [vmem:[%s3 + $0x8] sm:$0xf]
  %v70 = vld [vmem:[%s3 + $0xc] sm:$0xf]
  %v71 = vld [vmem:[%s4] sm:$0x1]
  %v73 = vperm.slane %v71, 0
  %v79 = vunpack.c.l.b16 %v67
  %v80 = vunpack.c.l.b16 %v68
  %v81 = vunpack.c.l.b16 %v69
  %v82 = vunpack.c.l.b16 %v70
  %v83 = vpack.c.b16 %v80, %v79
  %v84 = vpack.c.b16 %v82, %v81
  %vm87 = vcmask 261120
  %v89 = vsel %vm87, %v66, 0
  %91 = vmatpush.bf16.msra.mxu0 0
  %92 = vmatpush.bf16.msra.mxu0 0
  %93 = vmatpush.bf16.msra.mxu0 0
  %94 = vmatpush.bf16.msra.mxu0 0
  %95 = vmatpush.bf16.msra.mxu0 0
  %96 = vmatpush.bf16.msra.mxu0 0
  %97 = vmatpush.bf16.msra.mxu0 %v84
  %98 = vmatpush.bf16.msra.mxu0 %v83
  %99 = vmatmul.bf16.gmra.mxu0 %v89
  %v100 = vpop.f32.mrf.mxu0
  %v101 = vadd.f32 %v73, %v100
  %v102 = vpop.f32.mrf.mxu0
  %v103 = vadd.f32 %v73, %v102
  %104 = vdwg.mxu0
  %v105 = vmax.f32 %v101, 0.0
  %v106 = vmax.f32 %v103, 0.0
  %v107 = vpack.c.bf16 %v106, %v105
  %v108 = vld [vmem:[%s5] sm:$0xf]
  %v109 = vld [vmem:[%s5 + $0x4] sm:$0xf]
  %v110 = vld [vmem:[%s5 + $0x8] sm:$0xf]
  %v111 = vld [vmem:[%s5 + $0xc] sm:$0xf]
  %v112 = vld [vmem:[%s6] sm:$0x1]
  %v114 = vperm.slane %v112, 0
  %v120 = vunpack.c.l.b16 %v108
  %v121 = vunpack.c.l.b16 %v109
  %v122 = vunpack.c.l.b16 %v110
  %v123 = vunpack.c.l.b16 %v111
  %v124 = vpack.c.b16 %v121, %v120
  %v125 = vpack.c.b16 %v123, %v122
  %v129 = vsel %vm87, %v107, 0
  %131 = vmatpush.bf16.msra.mxu0 0
  %132 = vmatpush.bf16.msra.mxu0 0
  %133 = vmatpush.bf16.msra.mxu0 0
  %134 = vmatpush.bf16.msra.mxu0 0
  %135 = vmatpush.bf16.msra.mxu0 0
  %136 = vmatpush.bf16.msra.mxu0 0
  %137 = vmatpush.bf16.msra.mxu0 %v125
  %138 = vmatpush.bf16.msra.mxu0 %v124
  %139 = vmatmul.bf16.gmra.mxu0 %v129
  %v140 = vpop.f32.mrf.mxu0
  %v141 = vadd.f32 %v114, %v140
  %v142 = vpop.f32.mrf.mxu0
  %v143 = vadd.f32 %v114, %v142
  %144 = vdwg.mxu0
  %vm145 = vcmask 64512
  %146 = vst.msk [vmem:[%s7] sm:$0xff] %vm145, %v141
  %147 = vst.msk [vmem:[%s7 + $0x8] sm:$0xff] %vm145, %v143
  // Predicated region
  $region30: #{dqn_forward.1} parent=0 // pred_check
    _
  $region31: #{dqn_forward.1} parent=0 // pred_check_branch
    %149 = sbr.rel (0) target = $region33
  $region32: #{dqn_forward.1} parent=0 // pred_region
    _
  $region33: #{dqn_forward.1} parent=0 // pred_fallthru
    _
  // Predicated region
  $region34: #{dqn_forward.1} parent=0 // pred_check
    _
  $region35: #{dqn_forward.1} parent=0 // pred_check_branch
    %151 = sbr.rel (0) target = $region37
  $region36: #{dqn_forward.1} parent=0 // pred_region
    _
  $region37: #{dqn_forward.1} parent=0 // pred_fallthru
    _

</llo_original>
